<compile_context>
chip_gen: v6e
topology: v6e:2x2x1
jax: 0.10.0
libtpu: 0.0.40
codegen_flags: <defaults>
</compile_context>

<pallas_src>
import jax
import jax.numpy as jnp
import numpy as np
from jax.experimental import pallas as pl
from jax.experimental.pallas import tpu as pltpu

_MIB = 1024 * 1024


def _tpu_vmem_and_kind():
    """Trace-time hardware query with conservative fallbacks."""
    try:
        vmem = int(pltpu.get_tpu_info().vmem_capacity_bytes)
    except Exception:
        vmem = 64 * _MIB            # v7x-sized conservative default
    try:
        kind = jax.devices()[0].device_kind.lower()
    except Exception:
        kind = ""
    return vmem, kind


def _lora_logits_kernel(adapter_idx_ref,             # scalar prefetch (SMEM); used by index_maps
                        x_ref, w_ref, xa_ref, b_ref,  # VMEM inputs
                        logits_ref):                  # VMEM output
    # Base projection on the MXU (bf16 operands, f32 accumulation).
    base = jnp.dot(x_ref[...], w_ref[...], preferred_element_type=jnp.float32)
    # Active-adapter LoRA delta; `scaling` is already folded into xa.  Only the
    # tiny (r, tn) B tile is cast here — never the full [N, r, V] tensor.
    delta = jnp.dot(xa_ref[...], b_ref[...].astype(jnp.float32),
                    preferred_element_type=jnp.float32)
    logits_ref[...] = (base + delta).astype(logits_ref.dtype)


def prepare_weights(W, B, *, vocab_multiple=512):
    """One-time, LOAD-TIME weight prep (call outside the per-step path).

    * Casts the lm-head weight W to bf16 exactly once, so the forward never
      pays a per-call H*V cast pass over HBM.
    * Pads the vocab axis of W and of every adapter's B to a multiple of
      `vocab_multiple` so the kernel always gets lane-dense tiles (real vocabs
      such as 50257 are not multiples of 128).

    Returns (W_bf16 [H, V_pad], B_padded [N, r, V_pad], original V).
    """
    H, V = W.shape
    N, r, Vb = B.shape
    assert Vb == V
    V_pad = -(-V // vocab_multiple) * vocab_multiple
    if V_pad != V:
        W = jnp.pad(W, ((0, 0), (0, V_pad - V)))
        B = jnp.pad(B, ((0, 0), (0, 0), (0, V_pad - V)))
    return W.astype(jnp.bfloat16), B, V


def multi_adapter_forward(x, W, A, B, v_w, v_bias, scaling, adapter_idx, *,
                          vocab_size=None, tm=None, tn=None,
                          out_dtype=jnp.bfloat16):
    """Adapter-switched hot path of MultiAdapterWrapper.forward().

    x: [T, H] activations.  W: [H, V_pad] lm-head weight — ideally bf16 and
    vocab-padded via prepare_weights(); it is used exactly as stored (no
    per-call cast).  A: [N, H, r], B: [N, r, V_pad] LoRA factors.
    v_w: [H, 1] value head.  adapter_idx: int32 [1] (== set_adapter()).
    Returns (logits [T, vocab_size] in out_dtype, value [T, 1] f32).
    """
    T, H = x.shape
    V_pad = W.shape[1]
    V = int(vocab_size) if vocab_size is not None else V_pad
    N, _, r = A.shape

    # ---- per-generation tiling (v5e/v6e: 128 MiB VMEM, v7x: 64 MiB) ----
    vmem_cap, kind = _tpu_vmem_and_kind()
    is_v5e = ("v5e" in kind) or ("v5 lite" in kind) or ("v5lite" in kind)
    # Leave headroom below physical VMEM for Mosaic internal scratch/semaphores.
    vmem_limit = min(int(vmem_cap * 0.85), 100 * _MIB)
    tile_budget = int(vmem_limit * 0.70)

    if tn is None:
        # v5e is purely W-bandwidth-bound: 256 is enough; v6e/v7x amortize the
        # ~0.35 us/step grid overhead and DMA issue better at 512.
        tn = 256 if is_v5e else 512
    tn = min(tn, V_pad)
    assert V_pad % tn == 0, "pad the vocab axis (prepare_weights) to a multiple of tn"

    w_bytes = W.dtype.itemsize
    b_bytes = B.dtype.itemsize
    out_bytes = np.dtype(out_dtype).itemsize
    x_bytes = w_bytes  # x is cast to W's dtype below

    # Pad T to a sublane-friendly multiple of 8 so any tm < T stays legal.
    T_pad = -(-T // 8) * 8
    if T_pad != T:
        x = jnp.pad(x, ((0, T_pad - T), (0, 0)))

    if tm is None:
        # Scale tm with T so x stays resident across the whole vocab sweep:
        # W HBM traffic ~ (T/tm) * H * V * w_bytes, so bigger tm = fewer W
        # re-streams.  Budget: x/out/xa double-buffered, W triple-buffered
        # (conservative), plus the tiny B tile.
        fixed = 3 * H * tn * w_bytes + 2 * r * tn * b_bytes
        per_tm = 2 * H * x_bytes + 2 * tn * out_bytes + 2 * r * 4
        max_tm = max(8, (tile_budget - fixed) // per_tm)
        if T_pad <= max_tm:
            tm = T_pad
        else:
            tm = 8
            for cand in range(int(max_tm) - int(max_tm) % 8, 7, -8):
                if T_pad % cand == 0:
                    tm = cand
                    break
    assert T_pad % tm == 0

    grid = (T_pad // tm, V_pad // tn)
    decode_like = grid[0] == 1
    # Triple-buffer the dominant W stream only in the decode-like regime (the
    # kernel is pure W-DMA there) and only when there are enough vocab steps
    # for the extra buffer to matter.
    if decode_like and grid[1] >= 3:
        w_spec = pl.BlockSpec((H, tn), lambda i, j, idx: (0, j),
                              pipeline_mode=pl.Buffered(3))
    else:
        w_spec = pl.BlockSpec((H, tn), lambda i, j, idx: (0, j))

    adapter_idx = jnp.asarray(adapter_idx, dtype=jnp.int32).reshape((1,))

    # The only per-call cast is x (T*H, tiny next to the W stream).  W and B
    # are consumed exactly as stored — no per-call H*V or N*r*V HBM passes.
    x_c = x.astype(W.dtype)

    # Hoisted x @ A[active]: identical for every vocab tile, so computed once
    # outside the grid, with `scaling` folded in.  Kept f32 (r << bf16 pack).
    a_active = jax.lax.dynamic_index_in_dim(A, adapter_idx[0], axis=0,
                                            keepdims=False)
    xa = scaling * jnp.dot(x_c, a_active.astype(x_c.dtype),
                           preferred_element_type=jnp.float32)       # [T_pad, r]

    # Value head: N=1 matmul (lane-width-1 output -> masked stores) stays a
    # plain XLA op; reuses the already-materialized x_c instead of f32 x.
    value = jnp.dot(x_c, v_w.astype(x_c.dtype),
                    preferred_element_type=jnp.float32) + v_bias

    grid_spec = pltpu.PrefetchScalarGridSpec(
        num_scalar_prefetch=1,
        grid=grid,
        in_specs=[
            pl.BlockSpec((tm, H), lambda i, j, idx: (i, 0)),                # x tile
            w_spec,                                                         # W tile (dominant stream)
            pl.BlockSpec((tm, r), lambda i, j, idx: (i, 0)),                # xa tile
            pl.BlockSpec((None, r, tn), lambda i, j, idx: (idx[0], 0, j)),  # B[active] tile
        ],
        out_specs=pl.BlockSpec((tm, tn), lambda i, j, idx: (i, j)),         # logits tile
    )

    logits = pl.pallas_call(
        _lora_logits_kernel,
        grid_spec=grid_spec,
        out_shape=jax.ShapeDtypeStruct((T_pad, V_pad), out_dtype),
        compiler_params=pltpu.CompilerParams(
            # No accumulator / constant-index output -> fully parallel grid
            # (v7x 2-TC sharding).
            dimension_semantics=("parallel", "parallel"),
            vmem_limit_bytes=vmem_limit,
        ),
    )(adapter_idx, x_c, W, xa, B)

    # Strip vocab / token padding (no-op when already aligned).
    return logits[:T, :V], value[:T]


def _reference_matched(x, W_bf, A, B, v_w, v_bias, scaling, idx, out_dtype):
    """Reference with the same precision choices as the kernel path."""
    xc = x.astype(W_bf.dtype)
    base = jnp.dot(xc, W_bf, preferred_element_type=jnp.float32)
    xa = scaling * jnp.dot(xc, A[idx].astype(xc.dtype),
                           preferred_element_type=jnp.float32)
    delta = jnp.dot(xa, B[idx].astype(jnp.float32),
                    preferred_element_type=jnp.float32)
    logits = (base + delta).astype(out_dtype)
    value = jnp.dot(xc, v_w.astype(xc.dtype),
                    preferred_element_type=jnp.float32) + v_bias
    return logits, value


def _reference_f32(x, W, A, B, v_w, v_bias, scaling, idx):
    logits = x @ W + scaling * ((x @ A[idx]) @ B[idx])
    value = x @ v_w + v_bias
    return logits, value


if __name__ == "__main__":
    # Small, deterministic shapes (H multiple of 128, T multiple of 8, so the
    # same configuration is valid at real sizes).
    batch, seq, hidden, vocab = 2, 8, 128, 512
    n_adapters, rank = 3, 8
    lora_alpha = 16.0
    scaling = lora_alpha / rank           # standard PEFT LoRA scaling
    v_bias = 0.1

    key = jax.random.PRNGKey(0)
    kx, kw, ka, kb, kv = jax.random.split(key, 5)

    x = jax.random.normal(kx, (batch * seq, hidden), dtype=jnp.float32)
    W = jax.random.normal(kw, (hidden, vocab), dtype=jnp.float32) * 0.05
    A = jax.random.normal(ka, (n_adapters, hidden, rank), dtype=jnp.float32) * 0.05
    Bm = jax.random.normal(kb, (n_adapters, rank, vocab), dtype=jnp.float32) * 0.05
    v_w = jax.random.normal(kv, (hidden, 1), dtype=jnp.float32) * 0.05

    # One-time, load-time prep (outside the per-step path): W -> bf16, pad V.
    W_bf, B_pad, vocab_size = prepare_weights(W, Bm)

    # "set_adapter(adapter_name)" -> pick adapter 1 as the active one.
    adapter_idx = jnp.array([1], dtype=jnp.int32)

    logits, value = multi_adapter_forward(
        x, W_bf, A, B_pad, v_w, v_bias, scaling, adapter_idx,
        vocab_size=vocab_size)
    jax.block_until_ready((logits, value))

    # Precision-matched reference (bf16 x/W, f32 accumulation, bf16 logits).
    ref_logits, ref_value = _reference_matched(
        x, W_bf, A, B_pad, v_w, v_bias, scaling, 1, logits.dtype)
    ref_logits = ref_logits[:, :vocab_size]
    assert jnp.allclose(logits.astype(jnp.float32),
                        ref_logits.astype(jnp.float32), atol=2e-2, rtol=2e-2)
    assert jnp.allclose(value, ref_value, atol=1e-5, rtol=1e-5)

    # Loose sanity check of semantics against pure-f32 math.
    f32_logits, f32_value = _reference_f32(x, W, A, Bm, v_w, v_bias, scaling, 1)
    assert jnp.allclose(logits.astype(jnp.float32), f32_logits,
                        atol=5e-2, rtol=5e-2)
    assert jnp.allclose(value, f32_value, atol=2e-2, rtol=2e-2)

    print("KERNEL_OK")
</pallas_src>

<mosaic_0001>
module attributes {stable_mosaic.version = 11 : i64} {
  func.func @_lora_logits_kernel(%arg0: i32, %arg1: i32, %arg2: memref<1xi32, #tpu.memory_space<smem>>, %arg3: memref<16x128xbf16, #tpu.memory_space<vmem>>, %arg4: memref<128x512xbf16, #tpu.memory_space<vmem>>, %arg5: memref<16x8xf32, #tpu.memory_space<vmem>>, %arg6: memref<1x8x512xf32, #tpu.memory_space<vmem>>, %arg7: memref<16x512xbf16, #tpu.memory_space<vmem>>) attributes {dimension_semantics = [#tpu.dimension_semantics<parallel>, #tpu.dimension_semantics<parallel>], iteration_bounds = array<i64: 1, 1>, scalar_prefetch = 1 : i64, scratch_operands = 0 : i64, tpu.core_type = #tpu.core_type<tc>, window_params = [{transform_indices = @transform_0, window_bounds = array<i64: 16, 128>}, {transform_indices = @transform_1, window_bounds = array<i64: 128, 512>}, {transform_indices = @transform_2, window_bounds = array<i64: 16, 8>}, {transform_indices = @transform_3, window_bounds = array<i64: 1, 8, 512>}, {transform_indices = @transform_4, window_bounds = array<i64: 16, 512>}]} {
    %c0 = arith.constant 0 : index
    %c0_0 = arith.constant 0 : index
    %0 = vector.load %arg3[%c0, %c0_0] : memref<16x128xbf16, #tpu.memory_space<vmem>>, vector<16x128xbf16>
    %c0_1 = arith.constant 0 : index
    %c0_2 = arith.constant 0 : index
    %1 = vector.load %arg4[%c0_1, %c0_2] : memref<128x512xbf16, #tpu.memory_space<vmem>>, vector<128x512xbf16>
    %cst = arith.constant dense<0.000000e+00> : vector<16x512xf32>
    %2 = tpu.matmul %0, %1, %cst {dimension_numbers = #tpu.dot_dimension_numbers<[1], [0], [0], [1], [0, 0, 1, 1], [], []>} : vector<16x128xbf16>, vector<128x512xbf16>, vector<16x512xf32> -> vector<16x512xf32>
    %c0_3 = arith.constant 0 : index
    %c0_4 = arith.constant 0 : index
    %3 = vector.load %arg5[%c0_3, %c0_4] : memref<16x8xf32, #tpu.memory_space<vmem>>, vector<16x8xf32>
    %c0_5 = arith.constant 0 : index
    %c0_6 = arith.constant 0 : index
    %c0_7 = arith.constant 0 : index
    %4 = vector.load %arg6[%c0_5, %c0_6, %c0_7] : memref<1x8x512xf32, #tpu.memory_space<vmem>>, vector<1x8x512xf32>
    %5 = vector.shape_cast %4 : vector<1x8x512xf32> to vector<8x512xf32>
    %cst_8 = arith.constant dense<0.000000e+00> : vector<16x512xf32>
    %6 = tpu.matmul %3, %5, %cst_8 {dimension_numbers = #tpu.dot_dimension_numbers<[1], [0], [0], [1], [0, 0, 1, 1], [], []>} : vector<16x8xf32>, vector<8x512xf32>, vector<16x512xf32> -> vector<16x512xf32>
    %7 = arith.addf %2, %6 : vector<16x512xf32>
    %8 = arith.truncf %7 : vector<16x512xf32> to vector<16x512xbf16>
    %c0_9 = arith.constant 0 : index
    %c0_10 = arith.constant 0 : index
    %9 = vector.load %arg7[%c0_9, %c0_10] : memref<16x512xbf16, #tpu.memory_space<vmem>>, vector<16x512xbf16>
    tpu.vector_store %arg7[%c0_9, %c0_10], %8 {strides = array<i32>} : memref<16x512xbf16, #tpu.memory_space<vmem>>, vector<16x512xbf16>,
    return
  }
  func.func @transform_0(%arg0: i32, %arg1: i32, %arg2: memref<1xi32, #tpu.memory_space<smem>>) -> (i32, i32) {
    %c0_i32 = arith.constant 0 : i32
    %c0_i32_0 = arith.constant 0 : i32
    return %arg0, %c0_i32 : i32, i32
  }
  func.func @transform_1(%arg0: i32, %arg1: i32, %arg2: memref<1xi32, #tpu.memory_space<smem>>) -> (i32, i32) {
    %c0_i32 = arith.constant 0 : i32
    %c0_i32_0 = arith.constant 0 : i32
    return %c0_i32, %arg1 : i32, i32
  }
  func.func @transform_2(%arg0: i32, %arg1: i32, %arg2: memref<1xi32, #tpu.memory_space<smem>>) -> (i32, i32) {
    %c0_i32 = arith.constant 0 : i32
    %c0_i32_0 = arith.constant 0 : i32
    return %arg0, %c0_i32 : i32, i32
  }
  func.func @transform_3(%arg0: i32, %arg1: i32, %arg2: memref<1xi32, #tpu.memory_space<smem>>) -> (i32, i32, i32) {
    %c0 = arith.constant 0 : index
    %0 = memref.load %arg2[%c0] : memref<1xi32, #tpu.memory_space<smem>>
    %c0_i32 = arith.constant 0 : i32
    %c0_i32_0 = arith.constant 0 : i32
    return %0, %c0_i32, %arg1 : i32, i32, i32
  }
  func.func @transform_4(%arg0: i32, %arg1: i32, %arg2: memref<1xi32, #tpu.memory_space<smem>>) -> (i32, i32) {
    %c0_i32 = arith.constant 0 : i32
    return %arg0, %arg1 : i32, i32
  }
}

</mosaic_0001>

<llo_original>
// kernel: tpu_custom_call.1
$region0: #{tpu_custom_call.1}
  #allocation0 [shape = 'u32[]', space=smem, size = 0x4, offset = 0x4, fixed_abs, tag = 'smem constant byte address 0x4 - core index']
  #allocation1 [shape = 'u32[144,128]{1,0:T(1,128)}', space=vmem, size = 0x12000, scoped, tag = 'internal scratch']
  #allocation2 [shape = 's32[1]{0}', space=sflag, size = 0x4, scoped, tag = 'scoped memory for tpu_custom_call.1']
  #allocation3 [shape = 's32[1]{0:T(128)S(6)}', space=smem, size = 0x200, scoped, tag = 'prefetched SMEM operand 0']
  %s0 = inlined_call_operand.<no memory space> [shape: s32[1], index: 0, kind: input, shape index: {}]
  %s1 = inlined_call_operand.vmem [shape: bf16[16,128], index: 1, kind: input, shape index: {}]
  %s2 = inlined_call_operand.hbm [shape: bf16[128,512], index: 2, kind: input, shape index: {}]
  %s3 = inlined_call_operand.vmem [shape: f32[16,8], index: 3, kind: input, shape index: {}]
  %s4 = inlined_call_operand.hbm [shape: f32[3,8,512], index: 4, kind: input, shape index: {}]
  %s5 = inlined_call_operand.hbm [shape: bf16[16,512], index: 5, kind: output, shape index: {}]
  %s6 = sld [smem:[#allocation0]]
  $region34: #{tpu_custom_call.1} parent=0
    _
  %s8 = ssub.s32 1, %s6
  %s9 = scalar_select 0, %s8, %s6
  %10 = sst [smem:[#allocation3]] %s0
  $region1: #{tpu_custom_call.1} parent=0
    #allocation4 [shape = 'u8[131072]{0}', space=vmem, size = 0x20000, scoped, tag = 'input window, operand 2, single buffered']
    #allocation5 [shape = 's32[1]{0}', space=sflag, size = 0x4, scoped, tag = 'scoped memory for tpu_custom_call.1']
    #allocation6 [shape = 's32[1]{0}', space=sflag, size = 0x4, scoped, tag = 'scoped memory for tpu_custom_call.1']
    #allocation7 [shape = 'u8[16384]{0}', space=vmem, size = 0x4000, scoped, tag = 'input window, operand 4, single buffered']
    #allocation8 [shape = 's32[1]{0}', space=sflag, size = 0x4, scoped, tag = 'scoped memory for tpu_custom_call.1']
    #allocation9 [shape = 'u8[16384]{0}', space=vmem, size = 0x4000, scoped, tag = 'output window, operand 0, single buffered']
    %11 = vsyncpa [#allocation5], 0
    %12 = vsyncpa [#allocation8], 0
    %13 = vsyncpa [#allocation6], 0
    // Predicated region
    $region2: #{tpu_custom_call.1} parent=1 // pred_check
      _
    $region3: #{tpu_custom_call.1} parent=1 // pred_check_branch
      %15 = sbr.rel (0) target = $region5
    $region4: #{tpu_custom_call.1} parent=1 // pred_region
      _
    $region5: #{tpu_custom_call.1} parent=1 // pred_fallthru
      _
    // Predicated region
    $region6: #{tpu_custom_call.1} parent=1 // pred_check
      _
    $region7: #{tpu_custom_call.1} parent=1 // pred_check_branch
      %17 = sbr.rel (0) target = $region9
    $region8: #{tpu_custom_call.1} parent=1 // pred_region
      %s19 = ssub.s32 4096, 4096
      %20 = vsyncadd [#allocation5], %s19
      %s21 = sshll.u32 [#allocation4], 4
      %s22 = int_to_ptr.vmem [resolvable:$true] %s21
      %27 = dma.hbm_to_vmem [thread:$0]  %s2, 4096, %s22, [#allocation5], 256, 256, 16
    $region9: #{tpu_custom_call.1} parent=1 // pred_fallthru
      _
    // Predicated region
    $region10: #{tpu_custom_call.1} parent=1 // pred_check
      _
    $region11: #{tpu_custom_call.1} parent=1 // pred_check_branch
      %29 = sbr.rel (0) target = $region13
    $region12: #{tpu_custom_call.1} parent=1 // pred_region
      _
    $region13: #{tpu_custom_call.1} parent=1 // pred_fallthru
      _
    // Predicated region
    $region14: #{tpu_custom_call.1} parent=1 // pred_check
      _
    $region15: #{tpu_custom_call.1} parent=1 // pred_check_branch
      %31 = sbr.rel (0) target = $region17
    $region16: #{tpu_custom_call.1} parent=1 // pred_region
      %s32 = sld [smem:[#allocation3]]
      %s34 = ssub.s32 512, 512
      %35 = vsyncadd [#allocation8], %s34
      %s36 = smul.addr %s32, 4
      %s37 = smul.addr %s36, 128
      %s38 = scalar_lea.hbm %s4, %s37
      %s40 = sshll.u32 [#allocation7], 4
      %s41 = int_to_ptr.vmem [resolvable:$true] %s40
      %43 = dma.hbm_to_vmem [thread:$0]  %s38, 512, %s41, [#allocation8]
    $region17: #{tpu_custom_call.1} parent=1 // pred_fallthru
      _
    // Predicated region
    $region18: #{tpu_custom_call.1} parent=1 // pred_check
      _
    $region19: #{tpu_custom_call.1} parent=1 // pred_check_branch
      %45 = sbr.rel (0) target = $region21
    $region20: #{tpu_custom_call.1} parent=1 // pred_region
      %46 = dma.done [#allocation5], 4096
    $region21: #{tpu_custom_call.1} parent=1 // pred_fallthru
      _
    // Predicated region
    $region22: #{tpu_custom_call.1} parent=1 // pred_check
      _
    $region23: #{tpu_custom_call.1} parent=1 // pred_check_branch
      %48 = sbr.rel (0) target = $region25
    $region24: #{tpu_custom_call.1} parent=1 // pred_region
      %49 = dma.done [#allocation8], 512
    $region25: #{tpu_custom_call.1} parent=1 // pred_fallthru
      _
    %s50 = sld [smem:[#allocation3]]
    %v52 = vld [vmem:[%s1] sm:$0xf]
    %v53 = vld [vmem:[%s1 + $0x4] sm:$0xf]
    %v54 = vld [vmem:[#allocation4] sm:$0xff]
    %v55 = vld [vmem:[#allocation4 + $0x8] sm:$0xff]
    %v56 = vld [vmem:[#allocation4 + $0x10] sm:$0xff]
    %v57 = vld [vmem:[#allocation4 + $0x18] sm:$0xff]
    %v58 = vld [vmem:[#allocation4 + $0x20] sm:$0xff]
    %v59 = vld [vmem:[#allocation4 + $0x28] sm:$0xff]
    %v60 = vld [vmem:[#allocation4 + $0x30] sm:$0xff]
    %v61 = vld [vmem:[#allocation4 + $0x38] sm:$0xff]
    %v62 = vld [vmem:[#allocation4 + $0x40] sm:$0xff]
    %v63 = vld [vmem:[#allocation4 + $0x48] sm:$0xff]
    %v64 = vld [vmem:[#allocation4 + $0x50] sm:$0xff]
    %v65 = vld [vmem:[#allocation4 + $0x58] sm:$0xff]
    %v66 = vld [vmem:[#allocation4 + $0x60] sm:$0xff]
    %v67 = vld [vmem:[#allocation4 + $0x68] sm:$0xff]
    %v68 = vld [vmem:[#allocation4 + $0x70] sm:$0xff]
    %v69 = vld [vmem:[#allocation4 + $0x78] sm:$0xff]
    %v70 = vld [vmem:[#allocation4 + $0x80] sm:$0xff]
    %v71 = vld [vmem:[#allocation4 + $0x88] sm:$0xff]
    %v72 = vld [vmem:[#allocation4 + $0x90] sm:$0xff]
    %v73 = vld [vmem:[#allocation4 + $0x98] sm:$0xff]
    %v74 = vld [vmem:[#allocation4 + $0xa0] sm:$0xff]
    %v75 = vld [vmem:[#allocation4 + $0xa8] sm:$0xff]
    %v76 = vld [vmem:[#allocation4 + $0xb0] sm:$0xff]
    %v77 = vld [vmem:[#allocation4 + $0xb8] sm:$0xff]
    %v78 = vld [vmem:[#allocation4 + $0xc0] sm:$0xff]
    %v79 = vld [vmem:[#allocation4 + $0xc8] sm:$0xff]
    %v80 = vld [vmem:[#allocation4 + $0xd0] sm:$0xff]
    %v81 = vld [vmem:[#allocation4 + $0xd8] sm:$0xff]
    %v82 = vld [vmem:[#allocation4 + $0xe0] sm:$0xff]
    %v83 = vld [vmem:[#allocation4 + $0xe8] sm:$0xff]
    %v84 = vld [vmem:[#allocation4 + $0xf0] sm:$0xff]
    %v85 = vld [vmem:[#allocation4 + $0xf8] sm:$0xff]
    %v86 = vld [vmem:[%s3] sm:$0xff]
    %v87 = vld [vmem:[%s3 + $0x8] sm:$0xff]
    %v88 = vld [vmem:[#allocation7] sm:$0xff]
    %v89 = vld [vmem:[#allocation7 + $0x8] sm:$0xff]
    %v90 = vld [vmem:[#allocation7 + $0x10] sm:$0xff]
    %v91 = vld [vmem:[#allocation7 + $0x18] sm:$0xff]
    %vm92 = vcmask 64512
    %v94 = vsel %vm92, %v86, 0
    %v97 = vsel %vm92, %v87, 0
    %99 = vmatprep.subr.mxu0 0.0
    %100 = vmatpush1.msra.mxu0 0.0
    %101 = vmatprep.subr.mxu0 0.0
    %102 = vmatpush1.msra.mxu0 0.0
    %103 = vmatprep.subr.mxu0 0.0
    %104 = vmatpush1.msra.mxu0 0.0
    %105 = vmatprep.subr.mxu0 0.0
    %106 = vmatpush1.msra.mxu0 0.0
    %107 = vmatprep.subr.mxu0 0.0
    %108 = vmatpush1.msra.mxu0 0.0
    %109 = vmatprep.subr.mxu0 0.0
    %110 = vmatpush1.msra.mxu0 0.0
    %111 = vmatprep.subr.mxu0 0.0
    %112 = vmatpush1.msra.mxu0 0.0
    %113 = vmatprep.subr.mxu0 0.0
    %114 = vmatpush1.msra.mxu0 0.0
    %115 = vmatprep.subr.mxu0 0.0
    %116 = vmatpush1.msra.mxu0 0.0
    %117 = vmatprep.subr.mxu0 0.0
    %118 = vmatpush1.msra.mxu0 0.0
    %119 = vmatprep.subr.mxu0 0.0
    %120 = vmatpush1.msra.mxu0 0.0
    %121 = vmatprep.subr.mxu0 0.0
    %122 = vmatpush1.msra.mxu0 0.0
    %123 = vmatprep.subr.mxu0 0.0
    %124 = vmatpush1.msra.mxu0 0.0
    %125 = vmatprep.subr.mxu0 0.0
    %126 = vmatpush1.msra.mxu0 0.0
    %127 = vmatprep.subr.mxu0 0.0
    %128 = vmatpush1.msra.mxu0 0.0
    %129 = vmatprep.subr.mxu0 %v89
    %130 = vmatpush1.msra.mxu0 %v88
    %131 = vmatprep.subr.mxu0 0.0
    %132 = vmatpush2.msra.mxu0 0.0
    %133 = vmatprep.subr.mxu0 0.0
    %134 = vmatpush2.msra.mxu0 0.0
    %135 = vmatprep.subr.mxu0 0.0
    %136 = vmatpush2.msra.mxu0 0.0
    %137 = vmatprep.subr.mxu0 0.0
    %138 = vmatpush2.msra.mxu0 0.0
    %139 = vmatprep.subr.mxu0 0.0
    %140 = vmatpush2.msra.mxu0 0.0
    %141 = vmatprep.subr.mxu0 0.0
    %142 = vmatpush2.msra.mxu0 0.0
    %143 = vmatprep.subr.mxu0 0.0
    %144 = vmatpush2.msra.mxu0 0.0
    %145 = vmatprep.subr.mxu0 0.0
    %146 = vmatpush2.msra.mxu0 0.0
    %147 = vmatprep.subr.mxu0 0.0
    %148 = vmatpush2.msra.mxu0 0.0
    %149 = vmatprep.subr.mxu0 0.0
    %150 = vmatpush2.msra.mxu0 0.0
    %151 = vmatprep.subr.mxu0 0.0
    %152 = vmatpush2.msra.mxu0 0.0
    %153 = vmatprep.subr.mxu0 0.0
    %154 = vmatpush2.msra.mxu0 0.0
    %155 = vmatprep.subr.mxu0 0.0
    %156 = vmatpush2.msra.mxu0 0.0
    %157 = vmatprep.subr.mxu0 0.0
    %158 = vmatpush2.msra.mxu0 0.0
    %159 = vmatprep.subr.mxu0 0.0
    %160 = vmatpush2.msra.mxu0 0.0
    %161 = vmatprep.subr.mxu0 0.0
    %162 = vmatpush2.msra.mxu0 0.0
    %163 = vmatprep.mubr.f32.mxu0 0.0
    %164 = vmatmul.mubr.f32.gmra.mxu0 %v94
    %v165 = vpop.f32.mrf.mxu0
    %v166 = vadd.f32 0.0, %v165
    %v167 = vpop.f32.mrf.mxu0
    %v168 = vadd.f32 0.0, %v167
    %169 = vmatprep.mubr.f32.mxu0 0.0
    %170 = vmatmul.mubr.f32.gmra.mxu0 %v97
    %v171 = vpop.f32.mrf.mxu0
    %v172 = vadd.f32 0.0, %v171
    %v173 = vpop.f32.mrf.mxu0
    %v174 = vadd.f32 0.0, %v173
    %175 = vdwg.mxu0
    %176 = vmatprep.subr.mxu0 0.0
    %177 = vmatpush1.msra.mxu0 0.0
    %178 = vmatprep.subr.mxu0 0.0
    %179 = vmatpush1.msra.mxu0 0.0
    %180 = vmatprep.subr.mxu0 0.0
    %181 = vmatpush1.msra.mxu0 0.0
    %182 = vmatprep.subr.mxu0 0.0
    %183 = vmatpush1.msra.mxu0 0.0
    %184 = vmatprep.subr.mxu0 0.0
    %185 = vmatpush1.msra.mxu0 0.0
    %186 = vmatprep.subr.mxu0 0.0
    %187 = vmatpush1.msra.mxu0 0.0
    %188 = vmatprep.subr.mxu0 0.0
    %189 = vmatpush1.msra.mxu0 0.0
    %190 = vmatprep.subr.mxu0 0.0
    %191 = vmatpush1.msra.mxu0 0.0
    %192 = vmatprep.subr.mxu0 0.0
    %193 = vmatpush1.msra.mxu0 0.0
    %194 = vmatprep.subr.mxu0 0.0
    %195 = vmatpush1.msra.mxu0 0.0
    %196 = vmatprep.subr.mxu0 0.0
    %197 = vmatpush1.msra.mxu0 0.0
    %198 = vmatprep.subr.mxu0 0.0
    %199 = vmatpush1.msra.mxu0 0.0
    %200 = vmatprep.subr.mxu0 0.0
    %201 = vmatpush1.msra.mxu0 0.0
    %202 = vmatprep.subr.mxu0 0.0
    %203 = vmatpush1.msra.mxu0 0.0
    %204 = vmatprep.subr.mxu0 0.0
    %205 = vmatpush1.msra.mxu0 0.0
    %206 = vmatprep.subr.mxu0 %v91
    %207 = vmatpush1.msra.mxu0 %v90
    %208 = vmatprep.subr.mxu0 0.0
    %209 = vmatpush2.msra.mxu0 0.0
    %210 = vmatprep.subr.mxu0 0.0
    %211 = vmatpush2.msra.mxu0 0.0
    %212 = vmatprep.subr.mxu0 0.0
    %213 = vmatpush2.msra.mxu0 0.0
    %214 = vmatprep.subr.mxu0 0.0
    %215 = vmatpush2.msra.mxu0 0.0
    %216 = vmatprep.subr.mxu0 0.0
    %217 = vmatpush2.msra.mxu0 0.0
    %218 = vmatprep.subr.mxu0 0.0
    %219 = vmatpush2.msra.mxu0 0.0
    %220 = vmatprep.subr.mxu0 0.0
    %221 = vmatpush2.msra.mxu0 0.0
    %222 = vmatprep.subr.mxu0 0.0
    %223 = vmatpush2.msra.mxu0 0.0
    %224 = vmatprep.subr.mxu0 0.0
    %225 = vmatpush2.msra.mxu0 0.0
    %226 = vmatprep.subr.mxu0 0.0
    %227 = vmatpush2.msra.mxu0 0.0
    %228 = vmatprep.subr.mxu0 0.0
    %229 = vmatpush2.msra.mxu0 0.0
    %230 = vmatprep.subr.mxu0 0.0
    %231 = vmatpush2.msra.mxu0 0.0
    %232 = vmatprep.subr.mxu0 0.0
    %233 = vmatpush2.msra.mxu0 0.0
    %234 = vmatprep.subr.mxu0 0.0
    %235 = vmatpush2.msra.mxu0 0.0
    %236 = vmatprep.subr.mxu0 0.0
    %237 = vmatpush2.msra.mxu0 0.0
    %238 = vmatprep.subr.mxu0 0.0
    %239 = vmatpush2.msra.mxu0 0.0
    %240 = vmatprep.mubr.f32.mxu0 0.0
    %241 = vmatmul.mubr.f32.gmra.mxu0 %v94
    %v242 = vpop.f32.mrf.mxu0
    %v243 = vadd.f32 0.0, %v242
    %v244 = vpop.f32.mrf.mxu0
    %v245 = vadd.f32 0.0, %v244
    %246 = vmatprep.mubr.f32.mxu0 0.0
    %247 = vmatmul.mubr.f32.gmra.mxu0 %v97
    %v248 = vpop.f32.mrf.mxu0
    %v249 = vadd.f32 0.0, %v248
    %v250 = vpop.f32.mrf.mxu0
    %v251 = vadd.f32 0.0, %v250
    %252 = vdwg.mxu0
    %v255 = vunpack.c.l.b16 %v52
    %v256 = vunpack.c.l.b16 %v53
    %v257 = vpack.c.b16 %v256, %v255
    %v291 = vunpack.c.l.b16 %v54
    %v292 = vunpack.c.h.b16 %v54
    %v293 = vunpack.c.l.b16 %v55
    %v294 = vunpack.c.h.b16 %v55
    %v295 = vunpack.c.l.b16 %v56
    %v296 = vunpack.c.h.b16 %v56
    %v297 = vunpack.c.l.b16 %v57
    %v298 = vunpack.c.h.b16 %v57
    %v299 = vunpack.c.l.b16 %v58
    %v300 = vunpack.c.h.b16 %v58
    %v301 = vunpack.c.l.b16 %v59
    %v302 = vunpack.c.h.b16 %v59
    %v303 = vunpack.c.l.b16 %v60
    %v304 = vunpack.c.h.b16 %v60
    %v305 = vunpack.c.l.b16 %v61
    %v306 = vunpack.c.h.b16 %v61
    %v307 = vunpack.c.l.b16 %v62
    %v308 = vunpack.c.h.b16 %v62
    %v309 = vunpack.c.l.b16 %v63
    %v310 = vunpack.c.h.b16 %v63
    %v311 = vunpack.c.l.b16 %v64
    %v312 = vunpack.c.h.b16 %v64
    %v313 = vunpack.c.l.b16 %v65
    %v314 = vunpack.c.h.b16 %v65
    %v315 = vunpack.c.l.b16 %v66
    %v316 = vunpack.c.h.b16 %v66
    %v317 = vunpack.c.l.b16 %v67
    %v318 = vunpack.c.h.b16 %v67
    %v319 = vunpack.c.l.b16 %v68
    %v320 = vunpack.c.h.b16 %v68
    %v321 = vunpack.c.l.b16 %v69
    %v322 = vunpack.c.h.b16 %v69
    %v323 = vunpack.c.l.b16 %v70
    %v324 = vunpack.c.h.b16 %v70
    %v325 = vunpack.c.l.b16 %v71
    %v326 = vunpack.c.h.b16 %v71
    %v327 = vunpack.c.l.b16 %v72
    %v328 = vunpack.c.h.b16 %v72
    %v329 = vunpack.c.l.b16 %v73
    %v330 = vunpack.c.h.b16 %v73
    %v331 = vunpack.c.l.b16 %v74
    %v332 = vunpack.c.h.b16 %v74
    %v333 = vunpack.c.l.b16 %v75
    %v334 = vunpack.c.h.b16 %v75
    %v335 = vunpack.c.l.b16 %v76
    %v336 = vunpack.c.h.b16 %v76
    %v337 = vunpack.c.l.b16 %v77
    %v338 = vunpack.c.h.b16 %v77
    %v339 = vunpack.c.l.b16 %v78
    %v340 = vunpack.c.h.b16 %v78
    %v341 = vunpack.c.l.b16 %v79
    %v342 = vunpack.c.h.b16 %v79
    %v343 = vunpack.c.l.b16 %v80
    %v344 = vunpack.c.h.b16 %v80
    %v345 = vunpack.c.l.b16 %v81
    %v346 = vunpack.c.h.b16 %v81
    %v347 = vunpack.c.l.b16 %v82
    %v348 = vunpack.c.h.b16 %v82
    %v349 = vunpack.c.l.b16 %v83
    %v350 = vunpack.c.h.b16 %v83
    %v351 = vunpack.c.l.b16 %v84
    %v352 = vunpack.c.h.b16 %v84
    %v353 = vunpack.c.l.b16 %v85
    %v354 = vunpack.c.h.b16 %v85
    %v355 = vpack.c.b16 %v295, %v291
    %v356 = vpack.c.b16 %v296, %v292
    %v357 = vpack.c.b16 %v297, %v293
    %v358 = vpack.c.b16 %v298, %v294
    %v359 = vpack.c.b16 %v303, %v299
    %v360 = vpack.c.b16 %v304, %v300
    %v361 = vpack.c.b16 %v305, %v301
    %v362 = vpack.c.b16 %v306, %v302
    %v363 = vpack.c.b16 %v311, %v307
    %v364 = vpack.c.b16 %v312, %v308
    %v365 = vpack.c.b16 %v313, %v309
    %v366 = vpack.c.b16 %v314, %v310
    %v367 = vpack.c.b16 %v319, %v315
    %v368 = vpack.c.b16 %v320, %v316
    %v369 = vpack.c.b16 %v321, %v317
    %v370 = vpack.c.b16 %v322, %v318
    %v371 = vpack.c.b16 %v327, %v323
    %v372 = vpack.c.b16 %v328, %v324
    %v373 = vpack.c.b16 %v329, %v325
    %v374 = vpack.c.b16 %v330, %v326
    %v375 = vpack.c.b16 %v335, %v331
    %v376 = vpack.c.b16 %v336, %v332
    %v377 = vpack.c.b16 %v337, %v333
    %v378 = vpack.c.b16 %v338, %v334
    %v379 = vpack.c.b16 %v343, %v339
    %v380 = vpack.c.b16 %v344, %v340
    %v381 = vpack.c.b16 %v345, %v341
    %v382 = vpack.c.b16 %v346, %v342
    %v383 = vpack.c.b16 %v351, %v347
    %v384 = vpack.c.b16 %v352, %v348
    %v385 = vpack.c.b16 %v353, %v349
    %v386 = vpack.c.b16 %v354, %v350
    %419 = vmatprep.subr.bf16.mxu0 %v384
    %420 = vmatpush1.bf16.msra.mxu0 %v383
    %421 = vmatprep.subr.bf16.mxu0 %v380
    %422 = vmatpush1.bf16.msra.mxu0 %v379
    %423 = vmatprep.subr.bf16.mxu0 %v376
    %424 = vmatpush1.bf16.msra.mxu0 %v375
    %425 = vmatprep.subr.bf16.mxu0 %v372
    %426 = vmatpush1.bf16.msra.mxu0 %v371
    %427 = vmatprep.subr.bf16.mxu0 %v368
    %428 = vmatpush1.bf16.msra.mxu0 %v367
    %429 = vmatprep.subr.bf16.mxu0 %v364
    %430 = vmatpush1.bf16.msra.mxu0 %v363
    %431 = vmatprep.subr.bf16.mxu0 %v360
    %432 = vmatpush1.bf16.msra.mxu0 %v359
    %433 = vmatprep.subr.bf16.mxu0 %v356
    %434 = vmatpush1.bf16.msra.mxu0 %v355
    %435 = vmatprep.subr.bf16.mxu0 0
    %436 = vmatpush2.bf16.msra.mxu0 0
    %437 = vmatprep.subr.bf16.mxu0 0
    %438 = vmatpush2.bf16.msra.mxu0 0
    %439 = vmatprep.subr.bf16.mxu0 0
    %440 = vmatpush2.bf16.msra.mxu0 0
    %441 = vmatprep.subr.bf16.mxu0 0
    %442 = vmatpush2.bf16.msra.mxu0 0
    %443 = vmatprep.subr.bf16.mxu0 0
    %444 = vmatpush2.bf16.msra.mxu0 0
    %445 = vmatprep.subr.bf16.mxu0 0
    %446 = vmatpush2.bf16.msra.mxu0 0
    %447 = vmatprep.subr.bf16.mxu0 0
    %448 = vmatpush2.bf16.msra.mxu0 0
    %449 = vmatprep.subr.bf16.mxu0 0
    %450 = vmatpush2.bf16.msra.mxu0 0
    %451 = vmatprep.mubr.bf16.mxu0 0
    %452 = vmatmul.mubr.bf16.gmra.mxu0 %v257
    %v453 = vpop.f32.mrf.mxu0
    %v454 = vadd.f32 %v166, %v453
    %v455 = vpop.f32.mrf.mxu0
    %v456 = vadd.f32 %v168, %v455
    %v457 = vpop.f32.mrf.mxu0
    %v458 = vadd.f32 %v172, %v457
    %v459 = vpop.f32.mrf.mxu0
    %v460 = vadd.f32 %v174, %v459
    %461 = vdwg.mxu0
    %462 = vmatprep.subr.bf16.mxu0 %v386
    %463 = vmatpush1.bf16.msra.mxu0 %v385
    %464 = vmatprep.subr.bf16.mxu0 %v382
    %465 = vmatpush1.bf16.msra.mxu0 %v381
    %466 = vmatprep.subr.bf16.mxu0 %v378
    %467 = vmatpush1.bf16.msra.mxu0 %v377
    %468 = vmatprep.subr.bf16.mxu0 %v374
    %469 = vmatpush1.bf16.msra.mxu0 %v373
    %470 = vmatprep.subr.bf16.mxu0 %v370
    %471 = vmatpush1.bf16.msra.mxu0 %v369
    %472 = vmatprep.subr.bf16.mxu0 %v366
    %473 = vmatpush1.bf16.msra.mxu0 %v365
    %474 = vmatprep.subr.bf16.mxu0 %v362
    %475 = vmatpush1.bf16.msra.mxu0 %v361
    %476 = vmatprep.subr.bf16.mxu0 %v358
    %477 = vmatpush1.bf16.msra.mxu0 %v357
    %478 = vmatprep.subr.bf16.mxu0 0
    %479 = vmatpush2.bf16.msra.mxu0 0
    %480 = vmatprep.subr.bf16.mxu0 0
    %481 = vmatpush2.bf16.msra.mxu0 0
    %482 = vmatprep.subr.bf16.mxu0 0
    %483 = vmatpush2.bf16.msra.mxu0 0
    %484 = vmatprep.subr.bf16.mxu0 0
    %485 = vmatpush2.bf16.msra.mxu0 0
    %486 = vmatprep.subr.bf16.mxu0 0
    %487 = vmatpush2.bf16.msra.mxu0 0
    %488 = vmatprep.subr.bf16.mxu0 0
    %489 = vmatpush2.bf16.msra.mxu0 0
    %490 = vmatprep.subr.bf16.mxu0 0
    %491 = vmatpush2.bf16.msra.mxu0 0
    %492 = vmatprep.subr.bf16.mxu0 0
    %493 = vmatpush2.bf16.msra.mxu0 0
    %494 = vmatprep.mubr.bf16.mxu0 0
    %495 = vmatmul.mubr.bf16.gmra.mxu0 %v257
    %v496 = vpop.f32.mrf.mxu0
    %v497 = vadd.f32 %v243, %v496
    %v498 = vpop.f32.mrf.mxu0
    %v499 = vadd.f32 %v245, %v498
    %v500 = vpop.f32.mrf.mxu0
    %v501 = vadd.f32 %v249, %v500
    %v502 = vpop.f32.mrf.mxu0
    %v503 = vadd.f32 %v251, %v502
    %504 = vdwg.mxu0
    %v505 = vpack.c.bf16 %v458, %v454
    %v506 = vpack.c.bf16 %v460, %v456
    %v507 = vpack.c.bf16 %v501, %v497
    %v508 = vpack.c.bf16 %v503, %v499
    %v513 = vunpack.c.l.b16 %v505
    %v514 = vunpack.c.l.b16 %v506
    %v515 = vunpack.c.l.b16 %v507
    %v516 = vunpack.c.l.b16 %v508
    %v517 = vunpack.c.h.b16 %v505
    %v518 = vunpack.c.h.b16 %v506
    %v519 = vunpack.c.h.b16 %v507
    %v520 = vunpack.c.h.b16 %v508
    %v521 = vpack.c.b16 %v514, %v513
    %v522 = vpack.c.b16 %v516, %v515
    %v523 = vpack.c.b16 %v518, %v517
    %v524 = vpack.c.b16 %v520, %v519
    %529 = vst [vmem:[#allocation9] sm:$0xff] %v521
    %530 = vst [vmem:[#allocation9 + $0x8] sm:$0xff] %v522
    %531 = vst [vmem:[#allocation9 + $0x10] sm:$0xff] %v523
    %532 = vst [vmem:[#allocation9 + $0x18] sm:$0xff] %v524
    // Predicated region
    $region26: #{tpu_custom_call.1} parent=1 // pred_check
      _
    $region27: #{tpu_custom_call.1} parent=1 // pred_check_branch
      %534 = sbr.rel (0) target = $region29
    $region28: #{tpu_custom_call.1} parent=1 // pred_region
      %s536 = ssub.s32 512, 512
      %537 = vsyncadd [#allocation6], %s536
      %s538 = sshll.u32 [#allocation9], 4
      %s539 = int_to_ptr.vmem [resolvable:$true] %s538
      %544 = dma.vmem_to_hbm [thread:$0]  %s539, 512, %s5, [#allocation6], 256, 256, 16
    $region29: #{tpu_custom_call.1} parent=1 // pred_fallthru
      _
    // Predicated region
    $region30: #{tpu_custom_call.1} parent=1 // pred_check
      _
    $region31: #{tpu_custom_call.1} parent=1 // pred_check_branch
      %546 = sbr.rel (0) target = $region33
    $region32: #{tpu_custom_call.1} parent=1 // pred_region
      %547 = dma.done [#allocation6], 512
    $region33: #{tpu_custom_call.1} parent=1 // pred_fallthru
      _
    %548 = vsyncpa [#allocation5], 1
    %549 = vsyncpa [#allocation8], 1
    %550 = vsyncpa [#allocation6], 1

</llo_original>
